<compile_context>
chip_gen: v7x
topology: tpu7x:2x2x1
jax: 0.10.0
libtpu: 0.0.40
codegen_flags: <defaults>
</compile_context>

<pallas_src>
import functools

import jax
import jax.numpy as jnp
from jax.experimental import pallas as pl
from jax.experimental.pallas import tpu as pltpu

EMBEDDING_DIM = 6
HIDDEN_DIM = 6
TAGSET_SIZE = 3
VOCAB_SIZE = 9  # {'The','dog','ate','the','apple','Everybody','read','that','book'}

# Padded kernel-layout sizes.
H_PAD = 8        # hidden padded so gate slices start at 0/8/16/24
E_PAD = 8        # embedding (contraction) dim padded to a clean sublane multiple
TAG_PAD = 128    # lane-dense output -> single unmasked block store
SUBLANE = 8


def _round_up(x, m):
    return ((x + m - 1) // m) * m


def lstm_tagger_kernel(emb_ref, w_ih_ref, w_hh_ref, b_ref, w_tag_ref, b_tag_ref,
                       out_ref, h_hist, *, seq_len):
    HP = H_PAD

    # Deterministic padded rows for the post-loop tag matmul.
    h_hist[...] = jnp.zeros_like(h_hist)

    # (1) Batched input projection: one MXU matmul for ALL timesteps,
    #     removed from the serial per-step chain.
    gates_x = (jnp.dot(emb_ref[...], w_ih_ref[...],
                       preferred_element_type=jnp.float32)
               + b_ref[...])                                  # (T_pad, 4*H_PAD)

    w_hh = w_hh_ref[...]                                      # (H_PAD, 4*H_PAD)

    # (2) h/c live in vregs across the unrolled loop (no VMEM store->load per step).
    h = jnp.zeros((1, HP), jnp.float32)
    c = jnp.zeros((1, HP), jnp.float32)

    # seq_len is static at trace time -> fully unrolled recurrence.
    for t in range(seq_len):
        gates = gates_x[t:t + 1, :] + jnp.dot(
            h, w_hh, preferred_element_type=jnp.float32)      # (1, 4*H_PAD)

        # (3) Fused nonlinearities: one sigmoid + one tanh over the whole vreg,
        #     then aligned sub-slices for i/f/g/o.
        sg = jax.nn.sigmoid(gates)
        th = jnp.tanh(gates)
        i_g = sg[:, 0 * HP:1 * HP]
        f_g = sg[:, 1 * HP:2 * HP]
        g_g = th[:, 2 * HP:3 * HP]
        o_g = sg[:, 3 * HP:4 * HP]

        c = f_g * c + i_g * g_g
        h = o_g * jnp.tanh(c)

        # Off-critical-path record of h_t for the batched tag projection.
        h_hist[pl.ds(t, 1), :] = h

    # (4) Batched hidden2tag + log_softmax AFTER the recurrence; single lane-dense store.
    tag_space = (jnp.dot(h_hist[...], w_tag_ref[...],
                         preferred_element_type=jnp.float32)
                 + b_tag_ref[...])                            # (T_pad, TAG_PAD)
    lane = jax.lax.broadcasted_iota(jnp.int32, tag_space.shape, 1)
    tag_space = jnp.where(lane < TAGSET_SIZE, tag_space, -1e30)

    m = jnp.max(tag_space, axis=-1, keepdims=True)
    z = tag_space - m
    logp = z - jnp.log(jnp.sum(jnp.exp(z), axis=-1, keepdims=True))
    out_ref[...] = logp


def pack_params(params):
    """One-time repack of PyTorch-layout params into kernel layout.

    Pre-transposed, per-gate zero-padded H->H_PAD, contraction dims zero-padded,
    biases pre-summed. Padded weight rows/cols are zero so padded h/c lanes stay
    exactly 0 and never leak into real lanes.
    """
    emb_table, w_ih, w_hh, b_ih, b_hh, w_tag, b_tag = params
    H, E, TS = HIDDEN_DIM, EMBEDDING_DIM, TAGSET_SIZE

    def gate_pack(w, in_dim, in_pad):
        # (4H, in_dim) -> (in_pad, 4*H_PAD), gate order i,f,g,o preserved.
        w4 = w.reshape(4, H, in_dim)
        w4 = jnp.pad(w4, ((0, 0), (0, H_PAD - H), (0, in_pad - in_dim)))
        return jnp.transpose(w4, (2, 0, 1)).reshape(in_pad, 4 * H_PAD)

    w_ih_p = gate_pack(w_ih, E, E_PAD)                        # (E_PAD, 4*H_PAD)
    w_hh_p = gate_pack(w_hh, H, H_PAD)                        # (H_PAD, 4*H_PAD)

    b = (b_ih + b_hh).reshape(4, H)
    b_p = jnp.pad(b, ((0, 0), (0, H_PAD - H))).reshape(1, 4 * H_PAD)

    w_tag_p = jnp.pad(jnp.transpose(w_tag),
                      ((0, H_PAD - H), (0, TAG_PAD - TS)))    # (H_PAD, TAG_PAD)
    b_tag_p = jnp.pad(b_tag.reshape(1, TS), ((0, 0), (0, TAG_PAD - TS)))

    emb_p = jnp.pad(emb_table.astype(jnp.float32),
                    ((0, 0), (0, E_PAD - E)))                 # (VOCAB, E_PAD)
    return (emb_p, w_ih_p, w_hh_p, b_p, w_tag_p, b_tag_p)


def lstm_tagger_forward(sentence, packed):
    """sentence: (T,) int32 word indices. Returns (T, TAGSET) log-probs."""
    emb_p, w_ih_p, w_hh_p, b_p, w_tag_p, b_tag_p = packed
    T = sentence.shape[0]
    T_pad = _round_up(T, SUBLANE)

    # Only per-call glue: embedding gather (row-padded to a sublane multiple).
    # TODO(synk): the data-dependent embedding gather stays in plain JAX; an
    # in-kernel gather would need scalar-prefetch Element specs, overkill at T=5.
    idx = jnp.pad(sentence, (0, T_pad - T))
    embeds = emb_p[idx]                                       # (T_pad, E_PAD)

    vmem = pl.BlockSpec(memory_space=pltpu.MemorySpace.VMEM)
    out = pl.pallas_call(
        functools.partial(lstm_tagger_kernel, seq_len=T),
        out_shape=jax.ShapeDtypeStruct((T_pad, TAG_PAD), jnp.float32),
        in_specs=[vmem] * 6,
        out_specs=vmem,
        scratch_shapes=[pltpu.VMEM((T_pad, H_PAD), jnp.float32)],  # h history
    )(embeds, w_ih_p, w_hh_p, b_p, w_tag_p, b_tag_p)
    return out[:T, :TAGSET_SIZE]


def init_params(key):
    """Deterministic synthetic parameters with PyTorch-style shapes."""
    ks = jax.random.split(key, 7)

    def u(k, shape, fan):
        bound = 1.0 / jnp.sqrt(fan)
        return jax.random.uniform(k, shape, jnp.float32, -bound, bound)

    emb_table = jax.random.normal(ks[0], (VOCAB_SIZE, EMBEDDING_DIM), jnp.float32)
    w_ih = u(ks[1], (4 * HIDDEN_DIM, EMBEDDING_DIM), HIDDEN_DIM)   # gate order i,f,g,o
    w_hh = u(ks[2], (4 * HIDDEN_DIM, HIDDEN_DIM), HIDDEN_DIM)
    b_ih = u(ks[3], (4 * HIDDEN_DIM,), HIDDEN_DIM)
    b_hh = u(ks[4], (4 * HIDDEN_DIM,), HIDDEN_DIM)
    w_tag = u(ks[5], (TAGSET_SIZE, HIDDEN_DIM), HIDDEN_DIM)
    b_tag = u(ks[6], (TAGSET_SIZE,), HIDDEN_DIM)
    return (emb_table, w_ih, w_hh, b_ih, b_hh, w_tag, b_tag)


def reference_forward(sentence, params):
    """Pure-JAX reference matching nn.LSTM / nn.Linear / F.log_softmax semantics."""
    emb_table, w_ih, w_hh, b_ih, b_hh, w_tag, b_tag = params
    embeds = emb_table[sentence]
    H = HIDDEN_DIM
    h = jnp.zeros((H,), jnp.float32)
    c = jnp.zeros((H,), jnp.float32)
    outs = []
    for t in range(sentence.shape[0]):
        gates = w_ih @ embeds[t] + b_ih + w_hh @ h + b_hh
        i_g = jax.nn.sigmoid(gates[0:H])
        f_g = jax.nn.sigmoid(gates[H:2 * H])
        g_g = jnp.tanh(gates[2 * H:3 * H])
        o_g = jax.nn.sigmoid(gates[3 * H:4 * H])
        c = f_g * c + i_g * g_g
        h = o_g * jnp.tanh(c)
        tag_space = w_tag @ h + b_tag
        outs.append(jax.nn.log_softmax(tag_space))
    return jnp.stack(outs)


if __name__ == "__main__":
    key = jax.random.PRNGKey(0)
    params = init_params(key)
    packed = pack_params(params)   # one-time repack, NOT per forward call

    # "The dog ate the apple" -> indices from word_to_ix over the training data
    sentence = jnp.array([0, 1, 2, 3, 4], dtype=jnp.int32)   # (T,) = (5,)

    tag_scores = jax.block_until_ready(lstm_tagger_forward(sentence, packed))
    ref = reference_forward(sentence, params)

    assert tag_scores.shape == (5, TAGSET_SIZE)
    assert jnp.allclose(tag_scores, ref, atol=1e-4), "mismatch vs reference"
    print("KERNEL_OK")
</pallas_src>

<mosaic_0001>
module attributes {stable_mosaic.version = 11 : i64} {
  func.func @lstm_tagger_kernel(%arg0: memref<8x8xf32, #tpu.memory_space<vmem>>, %arg1: memref<8x32xf32, #tpu.memory_space<vmem>>, %arg2: memref<8x32xf32, #tpu.memory_space<vmem>>, %arg3: memref<1x32xf32, #tpu.memory_space<vmem>>, %arg4: memref<8x128xf32, #tpu.memory_space<vmem>>, %arg5: memref<1x128xf32, #tpu.memory_space<vmem>>, %arg6: memref<8x128xf32, #tpu.memory_space<vmem>>, %arg7: memref<8x8xf32, #tpu.memory_space<vmem>>) attributes {dimension_semantics = [], scalar_prefetch = 0 : i64, scratch_operands = 1 : i64, tpu.core_type = #tpu.core_type<tc>} {
    %cst = arith.constant 0.000000e+00 : f32
    %0 = vector.broadcast %cst : f32 to vector<8x8xf32>
    %c0 = arith.constant 0 : index
    %c0_0 = arith.constant 0 : index
    %1 = vector.load %arg7[%c0, %c0_0] : memref<8x8xf32, #tpu.memory_space<vmem>>, vector<8x8xf32>
    tpu.vector_store %arg7[%c0, %c0_0], %0 {strides = array<i32>} : memref<8x8xf32, #tpu.memory_space<vmem>>, vector<8x8xf32>,
    %c0_1 = arith.constant 0 : index
    %c0_2 = arith.constant 0 : index
    %2 = vector.load %arg0[%c0_1, %c0_2] : memref<8x8xf32, #tpu.memory_space<vmem>>, vector<8x8xf32>
    %c0_3 = arith.constant 0 : index
    %c0_4 = arith.constant 0 : index
    %3 = vector.load %arg1[%c0_3, %c0_4] : memref<8x32xf32, #tpu.memory_space<vmem>>, vector<8x32xf32>
    %cst_5 = arith.constant dense<0.000000e+00> : vector<8x32xf32>
    %4 = tpu.matmul %2, %3, %cst_5 {dimension_numbers = #tpu.dot_dimension_numbers<[1], [0], [0], [1], [0, 0, 1, 1], [], []>} : vector<8x8xf32>, vector<8x32xf32>, vector<8x32xf32> -> vector<8x32xf32>
    %c0_6 = arith.constant 0 : index
    %c0_7 = arith.constant 0 : index
    %5 = vector.load %arg3[%c0_6, %c0_7] : memref<1x32xf32, #tpu.memory_space<vmem>>, vector<1x32xf32>
    %6 = vector.broadcast %5 : vector<1x32xf32> to vector<8x32xf32>
    %7 = arith.addf %4, %6 : vector<8x32xf32>
    %c0_8 = arith.constant 0 : index
    %c0_9 = arith.constant 0 : index
    %8 = vector.load %arg2[%c0_8, %c0_9] : memref<8x32xf32, #tpu.memory_space<vmem>>, vector<8x32xf32>
    %cst_10 = arith.constant 0.000000e+00 : f32
    %9 = vector.broadcast %cst_10 : f32 to vector<1x8xf32>
    %cst_11 = arith.constant 0.000000e+00 : f32
    %10 = vector.broadcast %cst_11 : f32 to vector<1x8xf32>
    %11 = vector.extract_strided_slice %7 {offsets = [0, 0], sizes = [1, 32], strides = [1, 1]} : vector<8x32xf32> to vector<1x32xf32>
    %cst_12 = arith.constant dense<0.000000e+00> : vector<1x32xf32>
    %12 = tpu.matmul %9, %8, %cst_12 {dimension_numbers = #tpu.dot_dimension_numbers<[1], [0], [0], [1], [0, 0, 1, 1], [], []>} : vector<1x8xf32>, vector<8x32xf32>, vector<1x32xf32> -> vector<1x32xf32>
    %13 = arith.addf %11, %12 : vector<1x32xf32>
    %14 = arith.negf %13 : vector<1x32xf32>
    %15 = math.exp %14 : vector<1x32xf32>
    %cst_13 = arith.constant 1.000000e+00 : f32
    %16 = vector.broadcast %cst_13 : f32 to vector<1x32xf32>
    %17 = arith.addf %16, %15 : vector<1x32xf32>
    %18 = arith.divf %16, %17 : vector<1x32xf32>
    %19 = math.tanh %13 : vector<1x32xf32>
    %20 = vector.extract_strided_slice %18 {offsets = [0, 0], sizes = [1, 8], strides = [1, 1]} : vector<1x32xf32> to vector<1x8xf32>
    %21 = vector.extract_strided_slice %18 {offsets = [0, 8], sizes = [1, 8], strides = [1, 1]} : vector<1x32xf32> to vector<1x8xf32>
    %22 = vector.extract_strided_slice %19 {offsets = [0, 16], sizes = [1, 8], strides = [1, 1]} : vector<1x32xf32> to vector<1x8xf32>
    %23 = vector.extract_strided_slice %18 {offsets = [0, 24], sizes = [1, 8], strides = [1, 1]} : vector<1x32xf32> to vector<1x8xf32>
    %24 = arith.mulf %21, %10 : vector<1x8xf32>
    %25 = arith.mulf %20, %22 : vector<1x8xf32>
    %26 = arith.addf %24, %25 : vector<1x8xf32>
    %27 = math.tanh %26 : vector<1x8xf32>
    %28 = arith.mulf %23, %27 : vector<1x8xf32>
    %c0_14 = arith.constant 0 : index
    %c0_15 = arith.constant 0 : index
    %29 = vector.load %arg7[%c0_14, %c0_15] : memref<8x8xf32, #tpu.memory_space<vmem>>, vector<1x8xf32>
    tpu.vector_store %arg7[%c0_14, %c0_15], %28 {strides = array<i32>} : memref<8x8xf32, #tpu.memory_space<vmem>>, vector<1x8xf32>,
    %30 = vector.extract_strided_slice %7 {offsets = [1, 0], sizes = [1, 32], strides = [1, 1]} : vector<8x32xf32> to vector<1x32xf32>
    %cst_16 = arith.constant dense<0.000000e+00> : vector<1x32xf32>
    %31 = tpu.matmul %28, %8, %cst_16 {dimension_numbers = #tpu.dot_dimension_numbers<[1], [0], [0], [1], [0, 0, 1, 1], [], []>} : vector<1x8xf32>, vector<8x32xf32>, vector<1x32xf32> -> vector<1x32xf32>
    %32 = arith.addf %30, %31 : vector<1x32xf32>
    %33 = arith.negf %32 : vector<1x32xf32>
    %34 = math.exp %33 : vector<1x32xf32>
    %cst_17 = arith.constant 1.000000e+00 : f32
    %35 = vector.broadcast %cst_17 : f32 to vector<1x32xf32>
    %36 = arith.addf %35, %34 : vector<1x32xf32>
    %37 = arith.divf %35, %36 : vector<1x32xf32>
    %38 = math.tanh %32 : vector<1x32xf32>
    %39 = vector.extract_strided_slice %37 {offsets = [0, 0], sizes = [1, 8], strides = [1, 1]} : vector<1x32xf32> to vector<1x8xf32>
    %40 = vector.extract_strided_slice %37 {offsets = [0, 8], sizes = [1, 8], strides = [1, 1]} : vector<1x32xf32> to vector<1x8xf32>
    %41 = vector.extract_strided_slice %38 {offsets = [0, 16], sizes = [1, 8], strides = [1, 1]} : vector<1x32xf32> to vector<1x8xf32>
    %42 = vector.extract_strided_slice %37 {offsets = [0, 24], sizes = [1, 8], strides = [1, 1]} : vector<1x32xf32> to vector<1x8xf32>
    %43 = arith.mulf %40, %26 : vector<1x8xf32>
    %44 = arith.mulf %39, %41 : vector<1x8xf32>
    %45 = arith.addf %43, %44 : vector<1x8xf32>
    %46 = math.tanh %45 : vector<1x8xf32>
    %47 = arith.mulf %42, %46 : vector<1x8xf32>
    %c1 = arith.constant 1 : index
    %c0_18 = arith.constant 0 : index
    %48 = vector.load %arg7[%c1, %c0_18] : memref<8x8xf32, #tpu.memory_space<vmem>>, vector<1x8xf32>
    tpu.vector_store %arg7[%c1, %c0_18], %47 {strides = array<i32>} : memref<8x8xf32, #tpu.memory_space<vmem>>, vector<1x8xf32>,
    %49 = vector.extract_strided_slice %7 {offsets = [2, 0], sizes = [1, 32], strides = [1, 1]} : vector<8x32xf32> to vector<1x32xf32>
    %cst_19 = arith.constant dense<0.000000e+00> : vector<1x32xf32>
    %50 = tpu.matmul %47, %8, %cst_19 {dimension_numbers = #tpu.dot_dimension_numbers<[1], [0], [0], [1], [0, 0, 1, 1], [], []>} : vector<1x8xf32>, vector<8x32xf32>, vector<1x32xf32> -> vector<1x32xf32>
    %51 = arith.addf %49, %50 : vector<1x32xf32>
    %52 = arith.negf %51 : vector<1x32xf32>
    %53 = math.exp %52 : vector<1x32xf32>
    %cst_20 = arith.constant 1.000000e+00 : f32
    %54 = vector.broadcast %cst_20 : f32 to vector<1x32xf32>
    %55 = arith.addf %54, %53 : vector<1x32xf32>
    %56 = arith.divf %54, %55 : vector<1x32xf32>
    %57 = math.tanh %51 : vector<1x32xf32>
    %58 = vector.extract_strided_slice %56 {offsets = [0, 0], sizes = [1, 8], strides = [1, 1]} : vector<1x32xf32> to vector<1x8xf32>
    %59 = vector.extract_strided_slice %56 {offsets = [0, 8], sizes = [1, 8], strides = [1, 1]} : vector<1x32xf32> to vector<1x8xf32>
    %60 = vector.extract_strided_slice %57 {offsets = [0, 16], sizes = [1, 8], strides = [1, 1]} : vector<1x32xf32> to vector<1x8xf32>
    %61 = vector.extract_strided_slice %56 {offsets = [0, 24], sizes = [1, 8], strides = [1, 1]} : vector<1x32xf32> to vector<1x8xf32>
    %62 = arith.mulf %59, %45 : vector<1x8xf32>
    %63 = arith.mulf %58, %60 : vector<1x8xf32>
    %64 = arith.addf %62, %63 : vector<1x8xf32>
    %65 = math.tanh %64 : vector<1x8xf32>
    %66 = arith.mulf %61, %65 : vector<1x8xf32>
    %c2 = arith.constant 2 : index
    %c0_21 = arith.constant 0 : index
    %67 = vector.load %arg7[%c2, %c0_21] : memref<8x8xf32, #tpu.memory_space<vmem>>, vector<1x8xf32>
    tpu.vector_store %arg7[%c2, %c0_21], %66 {strides = array<i32>} : memref<8x8xf32, #tpu.memory_space<vmem>>, vector<1x8xf32>,
    %68 = vector.extract_strided_slice %7 {offsets = [3, 0], sizes = [1, 32], strides = [1, 1]} : vector<8x32xf32> to vector<1x32xf32>
    %cst_22 = arith.constant dense<0.000000e+00> : vector<1x32xf32>
    %69 = tpu.matmul %66, %8, %cst_22 {dimension_numbers = #tpu.dot_dimension_numbers<[1], [0], [0], [1], [0, 0, 1, 1], [], []>} : vector<1x8xf32>, vector<8x32xf32>, vector<1x32xf32> -> vector<1x32xf32>
    %70 = arith.addf %68, %69 : vector<1x32xf32>
    %71 = arith.negf %70 : vector<1x32xf32>
    %72 = math.exp %71 : vector<1x32xf32>
    %cst_23 = arith.constant 1.000000e+00 : f32
    %73 = vector.broadcast %cst_23 : f32 to vector<1x32xf32>
    %74 = arith.addf %73, %72 : vector<1x32xf32>
    %75 = arith.divf %73, %74 : vector<1x32xf32>
    %76 = math.tanh %70 : vector<1x32xf32>
    %77 = vector.extract_strided_slice %75 {offsets = [0, 0], sizes = [1, 8], strides = [1, 1]} : vector<1x32xf32> to vector<1x8xf32>
    %78 = vector.extract_strided_slice %75 {offsets = [0, 8], sizes = [1, 8], strides = [1, 1]} : vector<1x32xf32> to vector<1x8xf32>
    %79 = vector.extract_strided_slice %76 {offsets = [0, 16], sizes = [1, 8], strides = [1, 1]} : vector<1x32xf32> to vector<1x8xf32>
    %80 = vector.extract_strided_slice %75 {offsets = [0, 24], sizes = [1, 8], strides = [1, 1]} : vector<1x32xf32> to vector<1x8xf32>
    %81 = arith.mulf %78, %64 : vector<1x8xf32>
    %82 = arith.mulf %77, %79 : vector<1x8xf32>
    %83 = arith.addf %81, %82 : vector<1x8xf32>
    %84 = math.tanh %83 : vector<1x8xf32>
    %85 = arith.mulf %80, %84 : vector<1x8xf32>
    %c3 = arith.constant 3 : index
    %c0_24 = arith.constant 0 : index
    %86 = vector.load %arg7[%c3, %c0_24] : memref<8x8xf32, #tpu.memory_space<vmem>>, vector<1x8xf32>
    tpu.vector_store %arg7[%c3, %c0_24], %85 {strides = array<i32>} : memref<8x8xf32, #tpu.memory_space<vmem>>, vector<1x8xf32>,
    %87 = vector.extract_strided_slice %7 {offsets = [4, 0], sizes = [1, 32], strides = [1, 1]} : vector<8x32xf32> to vector<1x32xf32>
    %cst_25 = arith.constant dense<0.000000e+00> : vector<1x32xf32>
    %88 = tpu.matmul %85, %8, %cst_25 {dimension_numbers = #tpu.dot_dimension_numbers<[1], [0], [0], [1], [0, 0, 1, 1], [], []>} : vector<1x8xf32>, vector<8x32xf32>, vector<1x32xf32> -> vector<1x32xf32>
    %89 = arith.addf %87, %88 : vector<1x32xf32>
    %90 = arith.negf %89 : vector<1x32xf32>
    %91 = math.exp %90 : vector<1x32xf32>
    %cst_26 = arith.constant 1.000000e+00 : f32
    %92 = vector.broadcast %cst_26 : f32 to vector<1x32xf32>
    %93 = arith.addf %92, %91 : vector<1x32xf32>
    %94 = arith.divf %92, %93 : vector<1x32xf32>
    %95 = math.tanh %89 : vector<1x32xf32>
    %96 = vector.extract_strided_slice %94 {offsets = [0, 0], sizes = [1, 8], strides = [1, 1]} : vector<1x32xf32> to vector<1x8xf32>
    %97 = vector.extract_strided_slice %94 {offsets = [0, 8], sizes = [1, 8], strides = [1, 1]} : vector<1x32xf32> to vector<1x8xf32>
    %98 = vector.extract_strided_slice %95 {offsets = [0, 16], sizes = [1, 8], strides = [1, 1]} : vector<1x32xf32> to vector<1x8xf32>
    %99 = vector.extract_strided_slice %94 {offsets = [0, 24], sizes = [1, 8], strides = [1, 1]} : vector<1x32xf32> to vector<1x8xf32>
    %100 = arith.mulf %97, %83 : vector<1x8xf32>
    %101 = arith.mulf %96, %98 : vector<1x8xf32>
    %102 = arith.addf %100, %101 : vector<1x8xf32>
    %103 = math.tanh %102 : vector<1x8xf32>
    %104 = arith.mulf %99, %103 : vector<1x8xf32>
    %c4 = arith.constant 4 : index
    %c0_27 = arith.constant 0 : index
    %105 = vector.load %arg7[%c4, %c0_27] : memref<8x8xf32, #tpu.memory_space<vmem>>, vector<1x8xf32>
    tpu.vector_store %arg7[%c4, %c0_27], %104 {strides = array<i32>} : memref<8x8xf32, #tpu.memory_space<vmem>>, vector<1x8xf32>,
    %c0_28 = arith.constant 0 : index
    %c0_29 = arith.constant 0 : index
    %106 = vector.load %arg7[%c0_28, %c0_29] : memref<8x8xf32, #tpu.memory_space<vmem>>, vector<8x8xf32>
    %c0_30 = arith.constant 0 : index
    %c0_31 = arith.constant 0 : index
    %107 = vector.load %arg4[%c0_30, %c0_31] : memref<8x128xf32, #tpu.memory_space<vmem>>, vector<8x128xf32>
    %cst_32 = arith.constant dense<0.000000e+00> : vector<8x128xf32>
    %108 = tpu.matmul %106, %107, %cst_32 {dimension_numbers = #tpu.dot_dimension_numbers<[1], [0], [0], [1], [0, 0, 1, 1], [], []>} : vector<8x8xf32>, vector<8x128xf32>, vector<8x128xf32> -> vector<8x128xf32>
    %c0_33 = arith.constant 0 : index
    %c0_34 = arith.constant 0 : index
    %109 = vector.load %arg5[%c0_33, %c0_34] : memref<1x128xf32, #tpu.memory_space<vmem>>, vector<1x128xf32>
    %110 = vector.broadcast %109 : vector<1x128xf32> to vector<8x128xf32>
    %111 = arith.addf %108, %110 : vector<8x128xf32>
    %112 = tpu.iota {dimensions = array<i32: 1>} : vector<8x128xi32>
    %c3_i32 = arith.constant 3 : i32
    %113 = vector.broadcast %c3_i32 : i32 to vector<8x128xi32>
    %114 = arith.cmpi slt, %112, %113 : vector<8x128xi32>
    %cst_35 = arith.constant -1.000000e+30 : f32
    %115 = vector.broadcast %cst_35 : f32 to vector<8x128xf32>
    %116 = arith.select %114, %111, %115 : vector<8x128xi1>, vector<8x128xf32>
    %cst_36 = arith.constant dense<0xFF800000> : vector<8xf32>
    %117 = vector.multi_reduction <maximumf>, %116, %cst_36 [1] : vector<8x128xf32> to vector<8xf32>
    %118 = vector.shape_cast %117 : vector<8xf32> to vector<8x1xf32>
    %119 = vector.broadcast %118 : vector<8x1xf32> to vector<8x128xf32>
    %120 = arith.subf %116, %119 : vector<8x128xf32>
    %121 = math.exp %120 : vector<8x128xf32>
    %cst_37 = arith.constant dense<0.000000e+00> : vector<8xf32>
    %122 = vector.multi_reduction <add>, %121, %cst_37 [1] : vector<8x128xf32> to vector<8xf32>
    %123 = vector.shape_cast %122 : vector<8xf32> to vector<8x1xf32>
    %124 = math.log %123 : vector<8x1xf32>
    %125 = vector.broadcast %124 : vector<8x1xf32> to vector<8x128xf32>
    %126 = arith.subf %120, %125 : vector<8x128xf32>
    %c0_38 = arith.constant 0 : index
    %c0_39 = arith.constant 0 : index
    %127 = vector.load %arg6[%c0_38, %c0_39] : memref<8x128xf32, #tpu.memory_space<vmem>>, vector<8x128xf32>
    tpu.vector_store %arg6[%c0_38, %c0_39], %126 {strides = array<i32>} : memref<8x128xf32, #tpu.memory_space<vmem>>, vector<8x128xf32>,
    return
  }
}

</mosaic_0001>

<llo_original>
// kernel: tpu_custom_call.1
$region0: #{tpu_custom_call.1}
  #allocation0 [shape = 'u32[]', space=smem, size = 0x4, offset = 0x4, fixed_abs, tag = 'smem constant byte address 0x4 - core index']
  #allocation1 [shape = 'u32[144,128]{1,0:T(1,128)}', space=vmem, size = 0x12000, scoped, tag = 'internal scratch']
  #allocation2 [shape = 'f32[8,8]{1,0:T(8,128)}', space=vmem, size = 0x1000, scoped, tag = 'scratch operand']
  %s0 = inlined_call_operand.hbm [shape: f32[8,8], index: 0, kind: input, shape index: {}]
  %s1 = inlined_call_operand.hbm [shape: f32[8,32], index: 1, kind: input, shape index: {}]
  %s2 = inlined_call_operand.hbm [shape: f32[8,32], index: 2, kind: input, shape index: {}]
  %s3 = inlined_call_operand.vmem [shape: f32[1,32], index: 3, kind: input, shape index: {}]
  %s4 = inlined_call_operand.vmem [shape: f32[8,128], index: 4, kind: input, shape index: {}]
  %s5 = inlined_call_operand.vmem [shape: f32[1,128], index: 5, kind: input, shape index: {}]
  %s6 = inlined_call_operand.hbm [shape: f32[8,128], index: 6, kind: output, shape index: {}]
  %s7 = sld [smem:[#allocation0]]
  $region46: #{tpu_custom_call.1} parent=0
    _
  %s9 = ssub.s32 1, %s7
  %s10 = scalar_select 0, %s9, %s7
  $region1: #{tpu_custom_call.1} parent=0
    #allocation3 [shape = 'u8[4096]{0}', space=vmem, size = 0x1000, scoped, tag = 'input window, operand 0, single buffered']
    #allocation4 [shape = 's32[1]{0}', space=sflag, size = 0x4, scoped, tag = 'scoped memory for tpu_custom_call.1']
    #allocation5 [shape = 's32[1]{0}', space=sflag, size = 0x4, scoped, tag = 'scoped memory for tpu_custom_call.1']
    #allocation6 [shape = 'u8[4096]{0}', space=vmem, size = 0x1000, scoped, tag = 'input window, operand 1, single buffered']
    #allocation7 [shape = 's32[1]{0}', space=sflag, size = 0x4, scoped, tag = 'scoped memory for tpu_custom_call.1']
    #allocation8 [shape = 'u8[4096]{0}', space=vmem, size = 0x1000, scoped, tag = 'input window, operand 2, single buffered']
    #allocation9 [shape = 'u8[4096]{0}', space=vmem, size = 0x1000, scoped, tag = 'output window, operand 0, single buffered']
    %11 = vsyncpa [#allocation4], 0
    %12 = vsyncpa [#allocation7], 0
    %13 = vsyncpa [#allocation5], 0
    // Predicated region
    $region2: #{tpu_custom_call.1} parent=1 // pred_check
      _
    $region3: #{tpu_custom_call.1} parent=1 // pred_check_branch
      %15 = sbr.rel (0) target = $region5
    $region4: #{tpu_custom_call.1} parent=1 // pred_region
      %s17 = ssub.s32 128, 128
      %18 = vsyncadd [#allocation4], %s17
      %s20 = sshll.u32 [#allocation3], 4
      %s21 = int_to_ptr.vmem [resolvable:$true] %s20
      %23 = dma.hbm_to_vmem [thread:$0]  %s0, 128, %s21, [#allocation4]
    $region5: #{tpu_custom_call.1} parent=1 // pred_fallthru
      _
    // Predicated region
    $region6: #{tpu_custom_call.1} parent=1 // pred_check
      _
    $region7: #{tpu_custom_call.1} parent=1 // pred_check_branch
      %25 = sbr.rel (0) target = $region9
    $region8: #{tpu_custom_call.1} parent=1 // pred_region
      %s27 = ssub.s32 128, 128
      %28 = vsyncadd [#allocation7], %s27
      %s30 = sshll.u32 [#allocation6], 4
      %s31 = int_to_ptr.vmem [resolvable:$true] %s30
      %33 = dma.hbm_to_vmem [thread:$0]  %s1, 128, %s31, [#allocation7]
    $region9: #{tpu_custom_call.1} parent=1 // pred_fallthru
      _
    // Predicated region
    $region10: #{tpu_custom_call.1} parent=1 // pred_check
      _
    $region11: #{tpu_custom_call.1} parent=1 // pred_check_branch
      %35 = sbr.rel (0) target = $region13
    $region12: #{tpu_custom_call.1} parent=1 // pred_region
      %s37 = ssub.s32 128, 128
      %38 = vsyncadd [#allocation7], %s37
      %s40 = sshll.u32 [#allocation8], 4
      %s41 = int_to_ptr.vmem [resolvable:$true] %s40
      %43 = dma.hbm_to_vmem [thread:$0]  %s2, 128, %s41, [#allocation7]
    $region13: #{tpu_custom_call.1} parent=1 // pred_fallthru
      _
    // Predicated region
    $region14: #{tpu_custom_call.1} parent=1 // pred_check
      _
    $region15: #{tpu_custom_call.1} parent=1 // pred_check_branch
      %45 = sbr.rel (0) target = $region17
    $region16: #{tpu_custom_call.1} parent=1 // pred_region
      _
    $region17: #{tpu_custom_call.1} parent=1 // pred_fallthru
      _
    // Predicated region
    $region18: #{tpu_custom_call.1} parent=1 // pred_check
      _
    $region19: #{tpu_custom_call.1} parent=1 // pred_check_branch
      %47 = sbr.rel (0) target = $region21
    $region20: #{tpu_custom_call.1} parent=1 // pred_region
      _
    $region21: #{tpu_custom_call.1} parent=1 // pred_fallthru
      _
    // Predicated region
    $region22: #{tpu_custom_call.1} parent=1 // pred_check
      _
    $region23: #{tpu_custom_call.1} parent=1 // pred_check_branch
      %49 = sbr.rel (0) target = $region25
    $region24: #{tpu_custom_call.1} parent=1 // pred_region
      _
    $region25: #{tpu_custom_call.1} parent=1 // pred_fallthru
      _
    // Predicated region
    $region26: #{tpu_custom_call.1} parent=1 // pred_check
      _
    $region27: #{tpu_custom_call.1} parent=1 // pred_check_branch
      %51 = sbr.rel (0) target = $region29
    $region28: #{tpu_custom_call.1} parent=1 // pred_region
      %52 = dma.done [#allocation4], 128
    $region29: #{tpu_custom_call.1} parent=1 // pred_fallthru
      _
    // Predicated region
    $region30: #{tpu_custom_call.1} parent=1 // pred_check
      _
    $region31: #{tpu_custom_call.1} parent=1 // pred_check_branch
      %54 = sbr.rel (0) target = $region33
    $region32: #{tpu_custom_call.1} parent=1 // pred_region
      %55 = dma.done [#allocation7], 128
    $region33: #{tpu_custom_call.1} parent=1 // pred_fallthru
      _
    // Predicated region
    $region34: #{tpu_custom_call.1} parent=1 // pred_check
      _
    $region35: #{tpu_custom_call.1} parent=1 // pred_check_branch
      %57 = sbr.rel (0) target = $region37
    $region36: #{tpu_custom_call.1} parent=1 // pred_region
      %58 = dma.done [#allocation7], 128
    $region37: #{tpu_custom_call.1} parent=1 // pred_fallthru
      _
    %vm59 = vcmask 64512
    %60 = vst.msk [vmem:[#allocation2] sm:$0xff] %vm59, 0.0
    %v61 = vld [vmem:[#allocation3] sm:$0xff]
    %v62 = vld [vmem:[#allocation6] sm:$0xff]
    %v63 = vld [vmem:[%s3] sm:$0x1]
    %v65 = vlaneseq
    %v66 = vshrl.u32 %v65, 7
    %v67 = vsub.s32 0, %v66
    %v68 = vrot.slane %v63, %v67
    %v71 = vsel %vm59, %v61, 0
    %73 = vmatprep.subr.mxu0 0.0
    %74 = vmatpush1.msra.mxu0 %v62
    %75 = vmatprep.subr.mxu0 0.0
    %76 = vmatpush1.msra.mxu0 0.0
    %77 = vmatprep.subr.mxu0 0.0
    %78 = vmatpush1.msra.mxu0 0.0
    %79 = vmatprep.subr.mxu0 0.0
    %80 = vmatpush1.msra.mxu0 0.0
    %81 = vmatprep.subr.mxu0 0.0
    %82 = vmatpush1.msra.mxu0 0.0
    %83 = vmatprep.subr.mxu0 0.0
    %84 = vmatpush1.msra.mxu0 0.0
    %85 = vmatprep.subr.mxu0 0.0
    %86 = vmatpush1.msra.mxu0 0.0
    %87 = vmatprep.subr.mxu0 0.0
    %88 = vmatpush1.msra.mxu0 0.0
    %89 = vmatprep.subr.mxu0 0.0
    %90 = vmatpush1.msra.mxu0 0.0
    %91 = vmatprep.subr.mxu0 0.0
    %92 = vmatpush1.msra.mxu0 0.0
    %93 = vmatprep.subr.mxu0 0.0
    %94 = vmatpush1.msra.mxu0 0.0
    %95 = vmatprep.subr.mxu0 0.0
    %96 = vmatpush1.msra.mxu0 0.0
    %97 = vmatprep.subr.mxu0 0.0
    %98 = vmatpush1.msra.mxu0 0.0
    %99 = vmatprep.subr.mxu0 0.0
    %100 = vmatpush1.msra.mxu0 0.0
    %101 = vmatprep.subr.mxu0 0.0
    %102 = vmatpush1.msra.mxu0 0.0
    %103 = vmatprep.subr.mxu0 0.0
    %104 = vmatpush1.msra.mxu0 0.0
    %105 = vmatprep.subr.mxu0 0.0
    %106 = vmatpush1.msra.mxu0 0.0
    %107 = vmatprep.subr.mxu0 0.0
    %108 = vmatpush1.msra.mxu0 0.0
    %109 = vmatprep.subr.mxu0 0.0
    %110 = vmatpush1.msra.mxu0 0.0
    %111 = vmatprep.subr.mxu0 0.0
    %112 = vmatpush1.msra.mxu0 0.0
    %113 = vmatprep.subr.mxu0 0.0
    %114 = vmatpush1.msra.mxu0 0.0
    %115 = vmatprep.subr.mxu0 0.0
    %116 = vmatpush1.msra.mxu0 0.0
    %117 = vmatprep.subr.mxu0 0.0
    %118 = vmatpush1.msra.mxu0 0.0
    %119 = vmatprep.subr.mxu0 0.0
    %120 = vmatpush1.msra.mxu0 0.0
    %121 = vmatprep.subr.mxu0 0.0
    %122 = vmatpush1.msra.mxu0 0.0
    %123 = vmatprep.subr.mxu0 0.0
    %124 = vmatpush1.msra.mxu0 0.0
    %125 = vmatprep.subr.mxu0 0.0
    %126 = vmatpush1.msra.mxu0 0.0
    %127 = vmatprep.subr.mxu0 0.0
    %128 = vmatpush1.msra.mxu0 0.0
    %129 = vmatprep.subr.mxu0 0.0
    %130 = vmatpush1.msra.mxu0 0.0
    %131 = vmatprep.subr.mxu0 0.0
    %132 = vmatpush1.msra.mxu0 0.0
    %133 = vmatprep.subr.mxu0 0.0
    %134 = vmatpush1.msra.mxu0 0.0
    %135 = vmatprep.subr.mxu0 0.0
    %136 = vmatpush1.msra.mxu0 0.0
    %137 = vmatprep.mubr.f32.mxu0 0.0
    %138 = vmatmul.mubr.f32.gmra.mrb[0].mxu0 %v71
    %v139 = vpop.f32.mrb[0].mxu0
    %v140 = vadd.f32 %v68, %v139
    %v141 = vpop.f32.mrb[0].mxu0
    %142 = vdwg.mxu0
    %v143 = vld [vmem:[#allocation8] sm:$0xff]
    %v145 = vsel %vm59, 0.0, 0
    %147 = vmatprep.subr.mxu0 0.0
    %148 = vmatpush1.msra.mxu0 %v143
    %149 = vmatprep.subr.mxu0 0.0
    %150 = vmatpush1.msra.mxu0 0.0
    %151 = vmatprep.subr.mxu0 0.0
    %152 = vmatpush1.msra.mxu0 0.0
    %153 = vmatprep.subr.mxu0 0.0
    %154 = vmatpush1.msra.mxu0 0.0
    %155 = vmatprep.subr.mxu0 0.0
    %156 = vmatpush1.msra.mxu0 0.0
    %157 = vmatprep.subr.mxu0 0.0
    %158 = vmatpush1.msra.mxu0 0.0
    %159 = vmatprep.subr.mxu0 0.0
    %160 = vmatpush1.msra.mxu0 0.0
    %161 = vmatprep.subr.mxu0 0.0
    %162 = vmatpush1.msra.mxu0 0.0
    %163 = vmatprep.subr.mxu0 0.0
    %164 = vmatpush1.msra.mxu0 0.0
    %165 = vmatprep.subr.mxu0 0.0
    %166 = vmatpush1.msra.mxu0 0.0
    %167 = vmatprep.subr.mxu0 0.0
    %168 = vmatpush1.msra.mxu0 0.0
    %169 = vmatprep.subr.mxu0 0.0
    %170 = vmatpush1.msra.mxu0 0.0
    %171 = vmatprep.subr.mxu0 0.0
    %172 = vmatpush1.msra.mxu0 0.0
    %173 = vmatprep.subr.mxu0 0.0
    %174 = vmatpush1.msra.mxu0 0.0
    %175 = vmatprep.subr.mxu0 0.0
    %176 = vmatpush1.msra.mxu0 0.0
    %177 = vmatprep.subr.mxu0 0.0
    %178 = vmatpush1.msra.mxu0 0.0
    %179 = vmatprep.subr.mxu0 0.0
    %180 = vmatpush1.msra.mxu0 0.0
    %181 = vmatprep.subr.mxu0 0.0
    %182 = vmatpush1.msra.mxu0 0.0
    %183 = vmatprep.subr.mxu0 0.0
    %184 = vmatpush1.msra.mxu0 0.0
    %185 = vmatprep.subr.mxu0 0.0
    %186 = vmatpush1.msra.mxu0 0.0
    %187 = vmatprep.subr.mxu0 0.0
    %188 = vmatpush1.msra.mxu0 0.0
    %189 = vmatprep.subr.mxu0 0.0
    %190 = vmatpush1.msra.mxu0 0.0
    %191 = vmatprep.subr.mxu0 0.0
    %192 = vmatpush1.msra.mxu0 0.0
    %193 = vmatprep.subr.mxu0 0.0
    %194 = vmatpush1.msra.mxu0 0.0
    %195 = vmatprep.subr.mxu0 0.0
    %196 = vmatpush1.msra.mxu0 0.0
    %197 = vmatprep.subr.mxu0 0.0
    %198 = vmatpush1.msra.mxu0 0.0
    %199 = vmatprep.subr.mxu0 0.0
    %200 = vmatpush1.msra.mxu0 0.0
    %201 = vmatprep.subr.mxu0 0.0
    %202 = vmatpush1.msra.mxu0 0.0
    %203 = vmatprep.subr.mxu0 0.0
    %204 = vmatpush1.msra.mxu0 0.0
    %205 = vmatprep.subr.mxu0 0.0
    %206 = vmatpush1.msra.mxu0 0.0
    %207 = vmatprep.subr.mxu0 0.0
    %208 = vmatpush1.msra.mxu0 0.0
    %209 = vmatprep.subr.mxu0 0.0
    %210 = vmatpush1.msra.mxu0 0.0
    %211 = vmatprep.mubr.f32.mxu0 0.0
    %212 = vmatmul.mubr.f32.gmra.mrb[0].mxu0 %v145
    %v213 = vpop.f32.mrb[0].mxu0
    %v214 = vadd.f32 0.0, %v213
    %v215 = vpop.f32.mrb[0].mxu0
    %216 = vdwg.mxu0
    %v217 = vadd.f32 %v140, %v214
    %v218 = vxor.u32 %v217, 2147483648
    %v219 = vmul.f32 %v218, 1.442695
    %v220 = vpow.pop %v219
    %v221 = vadd.f32 %v220, 1.0
    %v222 = vrcp.pop %v221
    %v223 = vmul.f32 1.0, %v222
    %v224 = vtanh.pop %v217
    %v225 = vmul.f32 %v223, 0.0
    %227 = vrot.lane.b32.xlu0 %v224, 112
    %v228 = vpop.permute.xlu0 %227
    %v230 = vmul.f32 %v223, %v228
    %232 = vrot.lane.b32.xlu0 %v230, 8
    %v233 = vpop.permute.xlu0 %232
    %v235 = vadd.f32 %v225, %v233
    %v236 = vtanh.pop %v235
    %238 = vrot.lane.b32.xlu0 %v236, 16
    %v239 = vpop.permute.xlu0 %238
    %v241 = vmul.f32 %v223, %v239
    %243 = vrot.lane.b32.xlu0 %v241, 104
    %v244 = vpop.permute.xlu0 %243
    %vm246 = vcmask 57344
    %247 = vst.msk [vmem:[#allocation2] sm:$0x1] %vm246, %v244
    %v248 = vsel %vm59, %v244, 0
    %250 = vmatprep.subr.mxu0 0.0
    %251 = vmatpush1.msra.mxu0 %v143
    %252 = vmatprep.subr.mxu0 0.0
    %253 = vmatpush1.msra.mxu0 0.0
    %254 = vmatprep.subr.mxu0 0.0
    %255 = vmatpush1.msra.mxu0 0.0
    %256 = vmatprep.subr.mxu0 0.0
    %257 = vmatpush1.msra.mxu0 0.0
    %258 = vmatprep.subr.mxu0 0.0
    %259 = vmatpush1.msra.mxu0 0.0
    %260 = vmatprep.subr.mxu0 0.0
    %261 = vmatpush1.msra.mxu0 0.0
    %262 = vmatprep.subr.mxu0 0.0
    %263 = vmatpush1.msra.mxu0 0.0
    %264 = vmatprep.subr.mxu0 0.0
    %265 = vmatpush1.msra.mxu0 0.0
    %266 = vmatprep.subr.mxu0 0.0
    %267 = vmatpush1.msra.mxu0 0.0
    %268 = vmatprep.subr.mxu0 0.0
    %269 = vmatpush1.msra.mxu0 0.0
    %270 = vmatprep.subr.mxu0 0.0
    %271 = vmatpush1.msra.mxu0 0.0
    %272 = vmatprep.subr.mxu0 0.0
    %273 = vmatpush1.msra.mxu0 0.0
    %274 = vmatprep.subr.mxu0 0.0
    %275 = vmatpush1.msra.mxu0 0.0
    %276 = vmatprep.subr.mxu0 0.0
    %277 = vmatpush1.msra.mxu0 0.0
    %278 = vmatprep.subr.mxu0 0.0
    %279 = vmatpush1.msra.mxu0 0.0
    %280 = vmatprep.subr.mxu0 0.0
    %281 = vmatpush1.msra.mxu0 0.0
    %282 = vmatprep.subr.mxu0 0.0
    %283 = vmatpush1.msra.mxu0 0.0
    %284 = vmatprep.subr.mxu0 0.0
    %285 = vmatpush1.msra.mxu0 0.0
    %286 = vmatprep.subr.mxu0 0.0
    %287 = vmatpush1.msra.mxu0 0.0
    %288 = vmatprep.subr.mxu0 0.0
    %289 = vmatpush1.msra.mxu0 0.0
    %290 = vmatprep.subr.mxu0 0.0
    %291 = vmatpush1.msra.mxu0 0.0
    %292 = vmatprep.subr.mxu0 0.0
    %293 = vmatpush1.msra.mxu0 0.0
    %294 = vmatprep.subr.mxu0 0.0
    %295 = vmatpush1.msra.mxu0 0.0
    %296 = vmatprep.subr.mxu0 0.0
    %297 = vmatpush1.msra.mxu0 0.0
    %298 = vmatprep.subr.mxu0 0.0
    %299 = vmatpush1.msra.mxu0 0.0
    %300 = vmatprep.subr.mxu0 0.0
    %301 = vmatpush1.msra.mxu0 0.0
    %302 = vmatprep.subr.mxu0 0.0
    %303 = vmatpush1.msra.mxu0 0.0
    %304 = vmatprep.subr.mxu0 0.0
    %305 = vmatpush1.msra.mxu0 0.0
    %306 = vmatprep.subr.mxu0 0.0
    %307 = vmatpush1.msra.mxu0 0.0
    %308 = vmatprep.subr.mxu0 0.0
    %309 = vmatpush1.msra.mxu0 0.0
    %310 = vmatprep.subr.mxu0 0.0
    %311 = vmatpush1.msra.mxu0 0.0
    %312 = vmatprep.subr.mxu0 0.0
    %313 = vmatpush1.msra.mxu0 0.0
    %314 = vmatprep.mubr.f32.mxu0 0.0
    %315 = vmatmul.mubr.f32.gmra.mrb[0].mxu0 %v248
    %v316 = vpop.f32.mrb[0].mxu0
    %v317 = vadd.f32 0.0, %v316
    %v318 = vpop.f32.mrb[0].mxu0
    %319 = vdwg.mxu0
    %v321 = vrot.slane %v317, 7
    %v323 = vadd.f32 %v140, %v321
    %v324 = vxor.u32 %v323, 2147483648
    %v325 = vmul.f32 %v324, 1.442695
    %v326 = vpow.pop %v325
    %v327 = vadd.f32 %v326, 1.0
    %v328 = vrcp.pop %v327
    %v329 = vmul.f32 1.0, %v328
    %v330 = vtanh.pop %v323
    %v332 = vrot.slane %v235, 7
    %v334 = vmul.f32 %v329, %v332
    %336 = vrot.lane.b32.xlu0 %v330, 112
    %v337 = vpop.permute.xlu0 %336
    %v339 = vmul.f32 %v329, %v337
    %341 = vrot.lane.b32.xlu0 %v339, 8
    %v342 = vpop.permute.xlu0 %341
    %v344 = vadd.f32 %v334, %v342
    %v345 = vtanh.pop %v344
    %347 = vrot.lane.b32.xlu0 %v345, 16
    %v348 = vpop.permute.xlu0 %347
    %v350 = vmul.f32 %v329, %v348
    %352 = vrot.lane.b32.xlu0 %v350, 104
    %v353 = vpop.permute.xlu0 %352
    %vm355 = vcmask 58369
    %356 = vst.msk [vmem:[#allocation2] sm:$0x2] %vm355, %v353
    %v357 = vrot.slane %v350, 1
    %358 = vrot.lane.b32.xlu0 %v357, 104
    %v359 = vpop.permute.xlu0 %358
    %v360 = vsel %vm59, %v359, 0
    %362 = vmatprep.subr.mxu0 0.0
    %363 = vmatpush1.msra.mxu0 %v143
    %364 = vmatprep.subr.mxu0 0.0
    %365 = vmatpush1.msra.mxu0 0.0
    %366 = vmatprep.subr.mxu0 0.0
    %367 = vmatpush1.msra.mxu0 0.0
    %368 = vmatprep.subr.mxu0 0.0
    %369 = vmatpush1.msra.mxu0 0.0
    %370 = vmatprep.subr.mxu0 0.0
    %371 = vmatpush1.msra.mxu0 0.0
    %372 = vmatprep.subr.mxu0 0.0
    %373 = vmatpush1.msra.mxu0 0.0
    %374 = vmatprep.subr.mxu0 0.0
    %375 = vmatpush1.msra.mxu0 0.0
    %376 = vmatprep.subr.mxu0 0.0
    %377 = vmatpush1.msra.mxu0 0.0
    %378 = vmatprep.subr.mxu0 0.0
    %379 = vmatpush1.msra.mxu0 0.0
    %380 = vmatprep.subr.mxu0 0.0
    %381 = vmatpush1.msra.mxu0 0.0
    %382 = vmatprep.subr.mxu0 0.0
    %383 = vmatpush1.msra.mxu0 0.0
    %384 = vmatprep.subr.mxu0 0.0
    %385 = vmatpush1.msra.mxu0 0.0
    %386 = vmatprep.subr.mxu0 0.0
    %387 = vmatpush1.msra.mxu0 0.0
    %388 = vmatprep.subr.mxu0 0.0
    %389 = vmatpush1.msra.mxu0 0.0
    %390 = vmatprep.subr.mxu0 0.0
    %391 = vmatpush1.msra.mxu0 0.0
    %392 = vmatprep.subr.mxu0 0.0
    %393 = vmatpush1.msra.mxu0 0.0
    %394 = vmatprep.subr.mxu0 0.0
    %395 = vmatpush1.msra.mxu0 0.0
    %396 = vmatprep.subr.mxu0 0.0
    %397 = vmatpush1.msra.mxu0 0.0
    %398 = vmatprep.subr.mxu0 0.0
    %399 = vmatpush1.msra.mxu0 0.0
    %400 = vmatprep.subr.mxu0 0.0
    %401 = vmatpush1.msra.mxu0 0.0
    %402 = vmatprep.subr.mxu0 0.0
    %403 = vmatpush1.msra.mxu0 0.0
    %404 = vmatprep.subr.mxu0 0.0
    %405 = vmatpush1.msra.mxu0 0.0
    %406 = vmatprep.subr.mxu0 0.0
    %407 = vmatpush1.msra.mxu0 0.0
    %408 = vmatprep.subr.mxu0 0.0
    %409 = vmatpush1.msra.mxu0 0.0
    %410 = vmatprep.subr.mxu0 0.0
    %411 = vmatpush1.msra.mxu0 0.0
    %412 = vmatprep.subr.mxu0 0.0
    %413 = vmatpush1.msra.mxu0 0.0
    %414 = vmatprep.subr.mxu0 0.0
    %415 = vmatpush1.msra.mxu0 0.0
    %416 = vmatprep.subr.mxu0 0.0
    %417 = vmatpush1.msra.mxu0 0.0
    %418 = vmatprep.subr.mxu0 0.0
    %419 = vmatpush1.msra.mxu0 0.0
    %420 = vmatprep.subr.mxu0 0.0
    %421 = vmatpush1.msra.mxu0 0.0
    %422 = vmatprep.subr.mxu0 0.0
    %423 = vmatpush1.msra.mxu0 0.0
    %424 = vmatprep.subr.mxu0 0.0
    %425 = vmatpush1.msra.mxu0 0.0
    %426 = vmatprep.mubr.f32.mxu0 0.0
    %427 = vmatmul.mubr.f32.gmra.mrb[0].mxu0 %v360
    %v428 = vpop.f32.mrb[0].mxu0
    %v429 = vadd.f32 0.0, %v428
    %v430 = vpop.f32.mrb[0].mxu0
    %431 = vdwg.mxu0
    %v433 = vrot.slane %v429, 6
    %v435 = vadd.f32 %v140, %v433
    %v436 = vxor.u32 %v435, 2147483648
    %v437 = vmul.f32 %v436, 1.442695
    %v438 = vpow.pop %v437
    %v439 = vadd.f32 %v438, 1.0
    %v440 = vrcp.pop %v439
    %v441 = vmul.f32 1.0, %v440
    %v442 = vtanh.pop %v435
    %v444 = vrot.slane %v344, 7
    %v446 = vmul.f32 %v441, %v444
    %448 = vrot.lane.b32.xlu0 %v442, 112
    %v449 = vpop.permute.xlu0 %448
    %v451 = vmul.f32 %v441, %v449
    %453 = vrot.lane.b32.xlu0 %v451, 8
    %v454 = vpop.permute.xlu0 %453
    %v456 = vadd.f32 %v446, %v454
    %v457 = vtanh.pop %v456
    %459 = vrot.lane.b32.xlu0 %v457, 16
    %v460 = vpop.permute.xlu0 %459
    %v462 = vmul.f32 %v441, %v460
    %464 = vrot.lane.b32.xlu0 %v462, 104
    %v465 = vpop.permute.xlu0 %464
    %vm467 = vcmask 59394
    %468 = vst.msk [vmem:[#allocation2] sm:$0x4] %vm467, %v465
    %v469 = vrot.slane %v462, 2
    %470 = vrot.lane.b32.xlu0 %v469, 104
    %v471 = vpop.permute.xlu0 %470
    %v472 = vsel %vm59, %v471, 0
    %474 = vmatprep.subr.mxu0 0.0
    %475 = vmatpush1.msra.mxu0 %v143
    %476 = vmatprep.subr.mxu0 0.0
    %477 = vmatpush1.msra.mxu0 0.0
    %478 = vmatprep.subr.mxu0 0.0
    %479 = vmatpush1.msra.mxu0 0.0
    %480 = vmatprep.subr.mxu0 0.0
    %481 = vmatpush1.msra.mxu0 0.0
    %482 = vmatprep.subr.mxu0 0.0
    %483 = vmatpush1.msra.mxu0 0.0
    %484 = vmatprep.subr.mxu0 0.0
    %485 = vmatpush1.msra.mxu0 0.0
    %486 = vmatprep.subr.mxu0 0.0
    %487 = vmatpush1.msra.mxu0 0.0
    %488 = vmatprep.subr.mxu0 0.0
    %489 = vmatpush1.msra.mxu0 0.0
    %490 = vmatprep.subr.mxu0 0.0
    %491 = vmatpush1.msra.mxu0 0.0
    %492 = vmatprep.subr.mxu0 0.0
    %493 = vmatpush1.msra.mxu0 0.0
    %494 = vmatprep.subr.mxu0 0.0
    %495 = vmatpush1.msra.mxu0 0.0
    %496 = vmatprep.subr.mxu0 0.0
    %497 = vmatpush1.msra.mxu0 0.0
    %498 = vmatprep.subr.mxu0 0.0
    %499 = vmatpush1.msra.mxu0 0.0
    %500 = vmatprep.subr.mxu0 0.0
    %501 = vmatpush1.msra.mxu0 0.0
    %502 = vmatprep.subr.mxu0 0.0
    %503 = vmatpush1.msra.mxu0 0.0
    %504 = vmatprep.subr.mxu0 0.0
    %505 = vmatpush1.msra.mxu0 0.0
    %506 = vmatprep.subr.mxu0 0.0
    %507 = vmatpush1.msra.mxu0 0.0
    %508 = vmatprep.subr.mxu0 0.0
    %509 = vmatpush1.msra.mxu0 0.0
    %510 = vmatprep.subr.mxu0 0.0
    %511 = vmatpush1.msra.mxu0 0.0
    %512 = vmatprep.subr.mxu0 0.0
    %513 = vmatpush1.msra.mxu0 0.0
    %514 = vmatprep.subr.mxu0 0.0
    %515 = vmatpush1.msra.mxu0 0.0
    %516 = vmatprep.subr.mxu0 0.0
    %517 = vmatpush1.msra.mxu0 0.0
    %518 = vmatprep.subr.mxu0 0.0
    %519 = vmatpush1.msra.mxu0 0.0
    %520 = vmatprep.subr.mxu0 0.0
    %521 = vmatpush1.msra.mxu0 0.0
    %522 = vmatprep.subr.mxu0 0.0
    %523 = vmatpush1.msra.mxu0 0.0
    %524 = vmatprep.subr.mxu0 0.0
    %525 = vmatpush1.msra.mxu0 0.0
    %526 = vmatprep.subr.mxu0 0.0
    %527 = vmatpush1.msra.mxu0 0.0
    %528 = vmatprep.subr.mxu0 0.0
    %529 = vmatpush1.msra.mxu0 0.0
    %530 = vmatprep.subr.mxu0 0.0
    %531 = vmatpush1.msra.mxu0 0.0
    %532 = vmatprep.subr.mxu0 0.0
    %533 = vmatpush1.msra.mxu0 0.0
    %534 = vmatprep.subr.mxu0 0.0
    %535 = vmatpush1.msra.mxu0 0.0
    %536 = vmatprep.subr.mxu0 0.0
    %537 = vmatpush1.msra.mxu0 0.0
    %538 = vmatprep.mubr.f32.mxu0 0.0
    %539 = vmatmul.mubr.f32.gmra.mrb[0].mxu0 %v472
    %v540 = vpop.f32.mrb[0].mxu0
    %v541 = vadd.f32 0.0, %v540
    %v542 = vpop.f32.mrb[0].mxu0
    %543 = vdwg.mxu0
    %v545 = vrot.slane %v541, 5
    %v547 = vadd.f32 %v140, %v545
    %v548 = vxor.u32 %v547, 2147483648
    %v549 = vmul.f32 %v548, 1.442695
    %v550 = vpow.pop %v549
    %v551 = vadd.f32 %v550, 1.0
    %v552 = vrcp.pop %v551
    %v553 = vmul.f32 1.0, %v552
    %v554 = vtanh.pop %v547
    %v556 = vrot.slane %v456, 7
    %v558 = vmul.f32 %v553, %v556
    %560 = vrot.lane.b32.xlu0 %v554, 112
    %v561 = vpop.permute.xlu0 %560
    %v563 = vmul.f32 %v553, %v561
    %565 = vrot.lane.b32.xlu0 %v563, 8
    %v566 = vpop.permute.xlu0 %565
    %v568 = vadd.f32 %v558, %v566
    %v569 = vtanh.pop %v568
    %571 = vrot.lane.b32.xlu0 %v569, 16
    %v572 = vpop.permute.xlu0 %571
    %v574 = vmul.f32 %v553, %v572
    %576 = vrot.lane.b32.xlu0 %v574, 104
    %v577 = vpop.permute.xlu0 %576
    %vm579 = vcmask 60419
    %580 = vst.msk [vmem:[#allocation2] sm:$0x8] %vm579, %v577
    %v581 = vrot.slane %v574, 3
    %582 = vrot.lane.b32.xlu0 %v581, 104
    %v583 = vpop.permute.xlu0 %582
    %v584 = vsel %vm59, %v583, 0
    %586 = vmatprep.subr.mxu0 0.0
    %587 = vmatpush1.msra.mxu0 %v143
    %588 = vmatprep.subr.mxu0 0.0
    %589 = vmatpush1.msra.mxu0 0.0
    %590 = vmatprep.subr.mxu0 0.0
    %591 = vmatpush1.msra.mxu0 0.0
    %592 = vmatprep.subr.mxu0 0.0
    %593 = vmatpush1.msra.mxu0 0.0
    %594 = vmatprep.subr.mxu0 0.0
    %595 = vmatpush1.msra.mxu0 0.0
    %596 = vmatprep.subr.mxu0 0.0
    %597 = vmatpush1.msra.mxu0 0.0
    %598 = vmatprep.subr.mxu0 0.0
    %599 = vmatpush1.msra.mxu0 0.0
    %600 = vmatprep.subr.mxu0 0.0
    %601 = vmatpush1.msra.mxu0 0.0
    %602 = vmatprep.subr.mxu0 0.0
    %603 = vmatpush1.msra.mxu0 0.0
    %604 = vmatprep.subr.mxu0 0.0
    %605 = vmatpush1.msra.mxu0 0.0
    %606 = vmatprep.subr.mxu0 0.0
    %607 = vmatpush1.msra.mxu0 0.0
    %608 = vmatprep.subr.mxu0 0.0
    %609 = vmatpush1.msra.mxu0 0.0
    %610 = vmatprep.subr.mxu0 0.0
    %611 = vmatpush1.msra.mxu0 0.0
    %612 = vmatprep.subr.mxu0 0.0
    %613 = vmatpush1.msra.mxu0 0.0
    %614 = vmatprep.subr.mxu0 0.0
    %615 = vmatpush1.msra.mxu0 0.0
    %616 = vmatprep.subr.mxu0 0.0
    %617 = vmatpush1.msra.mxu0 0.0
    %618 = vmatprep.subr.mxu0 0.0
    %619 = vmatpush1.msra.mxu0 0.0
    %620 = vmatprep.subr.mxu0 0.0
    %621 = vmatpush1.msra.mxu0 0.0
    %622 = vmatprep.subr.mxu0 0.0
    %623 = vmatpush1.msra.mxu0 0.0
    %624 = vmatprep.subr.mxu0 0.0
    %625 = vmatpush1.msra.mxu0 0.0
    %626 = vmatprep.subr.mxu0 0.0
    %627 = vmatpush1.msra.mxu0 0.0
    %628 = vmatprep.subr.mxu0 0.0
    %629 = vmatpush1.msra.mxu0 0.0
    %630 = vmatprep.subr.mxu0 0.0
    %631 = vmatpush1.msra.mxu0 0.0
    %632 = vmatprep.subr.mxu0 0.0
    %633 = vmatpush1.msra.mxu0 0.0
    %634 = vmatprep.subr.mxu0 0.0
    %635 = vmatpush1.msra.mxu0 0.0
    %636 = vmatprep.subr.mxu0 0.0
    %637 = vmatpush1.msra.mxu0 0.0
    %638 = vmatprep.subr.mxu0 0.0
    %639 = vmatpush1.msra.mxu0 0.0
    %640 = vmatprep.subr.mxu0 0.0
    %641 = vmatpush1.msra.mxu0 0.0
    %642 = vmatprep.subr.mxu0 0.0
    %643 = vmatpush1.msra.mxu0 0.0
    %644 = vmatprep.subr.mxu0 0.0
    %645 = vmatpush1.msra.mxu0 0.0
    %646 = vmatprep.subr.mxu0 0.0
    %647 = vmatpush1.msra.mxu0 0.0
    %648 = vmatprep.subr.mxu0 0.0
    %649 = vmatpush1.msra.mxu0 0.0
    %650 = vmatprep.mubr.f32.mxu0 0.0
    %651 = vmatmul.mubr.f32.gmra.mrb[0].mxu0 %v584
    %v652 = vpop.f32.mrb[0].mxu0
    %v653 = vadd.f32 0.0, %v652
    %v654 = vpop.f32.mrb[0].mxu0
    %655 = vdwg.mxu0
    %v657 = vrot.slane %v653, 4
    %v659 = vadd.f32 %v140, %v657
    %v660 = vxor.u32 %v659, 2147483648
    %v661 = vmul.f32 %v660, 1.442695
    %v662 = vpow.pop %v661
    %v663 = vadd.f32 %v662, 1.0
    %v664 = vrcp.pop %v663
    %v665 = vmul.f32 1.0, %v664
    %v666 = vtanh.pop %v659
    %v668 = vrot.slane %v568, 7
    %v670 = vmul.f32 %v665, %v668
    %672 = vrot.lane.b32.xlu0 %v666, 112
    %v673 = vpop.permute.xlu0 %672
    %v675 = vmul.f32 %v665, %v673
    %677 = vrot.lane.b32.xlu0 %v675, 8
    %v678 = vpop.permute.xlu0 %677
    %v680 = vadd.f32 %v670, %v678
    %v681 = vtanh.pop %v680
    %683 = vrot.lane.b32.xlu0 %v681, 16
    %v684 = vpop.permute.xlu0 %683
    %v686 = vmul.f32 %v665, %v684
    %688 = vrot.lane.b32.xlu0 %v686, 104
    %v689 = vpop.permute.xlu0 %688
    %vm691 = vcmask 61444
    %692 = vst.msk [vmem:[#allocation2] sm:$0x10] %vm691, %v689
    %v693 = vld [vmem:[#allocation2] sm:$0xff]
    %v694 = vld [vmem:[%s4] sm:$0xff]
    %v695 = vld [vmem:[%s5] sm:$0x1]
    %v697 = vlaneseq
    %v698 = vshrl.u32 %v697, 7
    %v699 = vsub.s32 0, %v698
    %v700 = vrot.slane %v695, %v699
    %v703 = vsel %vm59, %v693, 0
    %705 = vmatprep.subr.mxu0 0.0
    %706 = vmatpush1.msra.mxu0 %v694
    %707 = vmatprep.subr.mxu0 0.0
    %708 = vmatpush1.msra.mxu0 0.0
    %709 = vmatprep.subr.mxu0 0.0
    %710 = vmatpush1.msra.mxu0 0.0
    %711 = vmatprep.subr.mxu0 0.0
    %712 = vmatpush1.msra.mxu0 0.0
    %713 = vmatprep.subr.mxu0 0.0
    %714 = vmatpush1.msra.mxu0 0.0
    %715 = vmatprep.subr.mxu0 0.0
    %716 = vmatpush1.msra.mxu0 0.0
    %717 = vmatprep.subr.mxu0 0.0
    %718 = vmatpush1.msra.mxu0 0.0
    %719 = vmatprep.subr.mxu0 0.0
    %720 = vmatpush1.msra.mxu0 0.0
    %721 = vmatprep.subr.mxu0 0.0
    %722 = vmatpush1.msra.mxu0 0.0
    %723 = vmatprep.subr.mxu0 0.0
    %724 = vmatpush1.msra.mxu0 0.0
    %725 = vmatprep.subr.mxu0 0.0
    %726 = vmatpush1.msra.mxu0 0.0
    %727 = vmatprep.subr.mxu0 0.0
    %728 = vmatpush1.msra.mxu0 0.0
    %729 = vmatprep.subr.mxu0 0.0
    %730 = vmatpush1.msra.mxu0 0.0
    %731 = vmatprep.subr.mxu0 0.0
    %732 = vmatpush1.msra.mxu0 0.0
    %733 = vmatprep.subr.mxu0 0.0
    %734 = vmatpush1.msra.mxu0 0.0
    %735 = vmatprep.subr.mxu0 0.0
    %736 = vmatpush1.msra.mxu0 0.0
    %737 = vmatprep.subr.mxu0 0.0
    %738 = vmatpush1.msra.mxu0 0.0
    %739 = vmatprep.subr.mxu0 0.0
    %740 = vmatpush1.msra.mxu0 0.0
    %741 = vmatprep.subr.mxu0 0.0
    %742 = vmatpush1.msra.mxu0 0.0
    %743 = vmatprep.subr.mxu0 0.0
    %744 = vmatpush1.msra.mxu0 0.0
    %745 = vmatprep.subr.mxu0 0.0
    %746 = vmatpush1.msra.mxu0 0.0
    %747 = vmatprep.subr.mxu0 0.0
    %748 = vmatpush1.msra.mxu0 0.0
    %749 = vmatprep.subr.mxu0 0.0
    %750 = vmatpush1.msra.mxu0 0.0
    %751 = vmatprep.subr.mxu0 0.0
    %752 = vmatpush1.msra.mxu0 0.0
    %753 = vmatprep.subr.mxu0 0.0
    %754 = vmatpush1.msra.mxu0 0.0
    %755 = vmatprep.subr.mxu0 0.0
    %756 = vmatpush1.msra.mxu0 0.0
    %757 = vmatprep.subr.mxu0 0.0
    %758 = vmatpush1.msra.mxu0 0.0
    %759 = vmatprep.subr.mxu0 0.0
    %760 = vmatpush1.msra.mxu0 0.0
    %761 = vmatprep.subr.mxu0 0.0
    %762 = vmatpush1.msra.mxu0 0.0
    %763 = vmatprep.subr.mxu0 0.0
    %764 = vmatpush1.msra.mxu0 0.0
    %765 = vmatprep.subr.mxu0 0.0
    %766 = vmatpush1.msra.mxu0 0.0
    %767 = vmatprep.subr.mxu0 0.0
    %768 = vmatpush1.msra.mxu0 0.0
    %769 = vmatprep.mubr.f32.mxu0 0.0
    %770 = vmatmul.mubr.f32.gmra.mrb[0].mxu0 %v703
    %v771 = vpop.f32.mrb[0].mxu0
    %v772 = vadd.f32 %v700, %v771
    %v773 = vpop.f32.mrb[0].mxu0
    %774 = vdwg.mxu0
    %v775 = vlaneseq
    %v776 = vand.u32 %v775, 127
    %vm777 = vcmp.lt.s32.totalorder %v776, 3
    %v778 = vsel %vm777, %v772, -1e+30
    %779 = vmax.xlane.f32.xlu0 %v778
    %v780 = vpop.xlane.xlu0 %779
    %v781 = vsub.f32 %v778, %v780
    %v782 = vmul.f32 %v781, 1.442695
    %v783 = vpow.pop %v782
    %784 = vadd.xlane.f32.xlu0 %v783
    %v785 = vpop.xlane.xlu0 %784
    %v786 = vlog2.pop %v785
    %v787 = vmul.f32 %v786, 0.6931472
    %v788 = vsub.f32 %v781, %v787
    %789 = vst [vmem:[#allocation9] sm:$0xff] %v788
    // Predicated region
    $region38: #{tpu_custom_call.1} parent=1 // pred_check
      _
    $region39: #{tpu_custom_call.1} parent=1 // pred_check_branch
      %791 = sbr.rel (0) target = $region41
    $region40: #{tpu_custom_call.1} parent=1 // pred_region
      %s793 = ssub.s32 128, 128
      %794 = vsyncadd [#allocation5], %s793
      %s796 = sshll.u32 [#allocation9], 4
      %s797 = int_to_ptr.vmem [resolvable:$true] %s796
      %799 = dma.vmem_to_hbm [thread:$0]  %s797, 128, %s6, [#allocation5]
    $region41: #{tpu_custom_call.1} parent=1 // pred_fallthru
      _
    // Predicated region
    $region42: #{tpu_custom_call.1} parent=1 // pred_check
      _
    $region43: #{tpu_custom_call.1} parent=1 // pred_check_branch
      %801 = sbr.rel (0) target = $region45
    $region44: #{tpu_custom_call.1} parent=1 // pred_region
      %802 = dma.done [#allocation5], 128
    $region45: #{tpu_custom_call.1} parent=1 // pred_fallthru
      _
    %803 = vsyncpa [#allocation4], 1
    %804 = vsyncpa [#allocation7], 1
    %805 = vsyncpa [#allocation5], 1

</llo_original>
